<compile_context>
chip_gen: v7x
topology: tpu7x:2x2x1
jax: 0.10.0
libtpu: 0.0.40
codegen_flags: <defaults>
</compile_context>

<pallas_src>
import functools

import jax
import jax.numpy as jnp
from jax.experimental import pallas as pl
from jax.experimental.pallas import tpu as pltpu

INPUT_SIZE = 247
HIDDEN_SIZE = 128
OUTPUT_SIZE = 3


def _round_up(x, m):
    return ((x + m - 1) // m) * m


def _mlp_kernel(x_ref, w1_ref, b1_ref, w2_ref, b2_ref, o_ref):
    # fc1 on the MXU (f32 operands, f32 accumulation); bias + ReLU on the VPU.
    h = jnp.dot(x_ref[...], w1_ref[...], preferred_element_type=jnp.float32)
    h = jnp.maximum(h + b1_ref[...], 0.0)
    # fc2 on the MXU; the tiny N=3 output is padded internally by Mosaic.
    y = jnp.dot(h, w2_ref[...], preferred_element_type=jnp.float32)
    o_ref[...] = (y + b2_ref[...]).astype(o_ref.dtype)


@functools.partial(jax.jit, static_argnames=("block_b",))
def laser_regression(x, w1, b1, w2, b2, *, block_b=512):
    """y = relu(x @ w1 + b1) @ w2 + b2  (PyTorch LaserRegression.forward).

    x : (B, in_f) f32 ; w1: (in_f, hid) ; b1: (1, hid) ; w2: (hid, out_f) ;
    b2: (1, out_f).  Weights are stored [in_features, out_features]
    (PyTorch weight transposed).  All operands go to the kernel unpadded and
    uncast; the output is exactly (B, out_f) with no post-kernel slicing.
    """
    B, in_f = x.shape
    hid = w1.shape[1]
    out_f = w2.shape[1]

    # ---- batch tiling ------------------------------------------------------
    # Single block when the batch fits (block == full dim is always legal).
    # Otherwise pick an even number of nearly-equal, 8-row-aligned blocks so a
    # v7x megacore gets balanced work; blocks stay large enough (~block_b/2+)
    # to amortize the ~0.35us/step grid overhead.
    if B <= block_b:
        blk = B
    else:
        n_blocks = 2 * pl.cdiv(pl.cdiv(B, block_b), 2)   # even block count
        blk = _round_up(pl.cdiv(B, n_blocks), 8)
    grid = (pl.cdiv(B, blk),)   # ragged last block: OOB rows are discarded.

    flops = 2 * B * (in_f * hid + hid * out_f)
    bytes_accessed = 4 * (B * in_f + in_f * hid + hid + hid * out_f + out_f
                          + B * out_f)

    return pl.pallas_call(
        _mlp_kernel,
        out_shape=jax.ShapeDtypeStruct((B, out_f), jnp.float32),
        grid_spec=pl.GridSpec(
            grid=grid,
            in_specs=[
                pl.BlockSpec((blk, in_f), lambda i: (i, 0)),    # x tile (full K)
                pl.BlockSpec((in_f, hid), lambda i: (0, 0)),    # W1 (resident)
                pl.BlockSpec((1, hid), lambda i: (0, 0)),       # b1 (resident)
                pl.BlockSpec((hid, out_f), lambda i: (0, 0)),   # W2 (resident)
                pl.BlockSpec((1, out_f), lambda i: (0, 0)),     # b2 (resident)
            ],
            out_specs=pl.BlockSpec((blk, out_f), lambda i: (i, 0)),
        ),
        compiler_params=pltpu.CompilerParams(
            dimension_semantics=("parallel",),
        ),
        cost_estimate=pl.CostEstimate(
            flops=flops, transcendentals=0, bytes_accessed=bytes_accessed),
    )(x, w1, b1, w2, b2)


def init_params(key, input_size, hidden_size, output_size):
    """Deterministic init mirroring PyTorch nn.Linear default (uniform +-1/sqrt(fan_in))."""
    k1, k2, k3, k4 = jax.random.split(key, 4)
    bound1 = 1.0 / jnp.sqrt(jnp.float32(input_size))
    bound2 = 1.0 / jnp.sqrt(jnp.float32(hidden_size))
    w1 = jax.random.uniform(k1, (input_size, hidden_size), jnp.float32, -bound1, bound1)
    b1 = jax.random.uniform(k2, (1, hidden_size), jnp.float32, -bound1, bound1)
    w2 = jax.random.uniform(k3, (hidden_size, output_size), jnp.float32, -bound2, bound2)
    b2 = jax.random.uniform(k4, (1, output_size), jnp.float32, -bound2, bound2)
    return w1, b1, w2, b2


if __name__ == "__main__":
    key = jax.random.PRNGKey(0)
    kx, kp = jax.random.split(key)

    # Small, non-aligned batch; block_b=16 forces the multi-block grid path
    # (blocks of 16,16,5 -> ragged last block, unmasked reads, tiny-N store).
    B = 37
    x = jax.random.normal(kx, (B, INPUT_SIZE), dtype=jnp.float32)
    w1, b1, w2, b2 = init_params(kp, INPUT_SIZE, HIDDEN_SIZE, OUTPUT_SIZE)

    out = laser_regression(x, w1, b1, w2, b2, block_b=16)
    out = jax.block_until_ready(out)

    # Pure-JAX f32 reference (same math as the PyTorch forward).
    ref = jnp.maximum(x @ w1 + b1, 0.0) @ w2 + b2
    assert out.shape == (B, OUTPUT_SIZE)
    # Both the kernel and the jnp reference may run f32 matmuls with bf16 MXU
    # passes at default precision, so allow a small tolerance.
    assert jnp.allclose(out, ref, atol=1e-2, rtol=1e-2), (
        f"max abs diff {jnp.max(jnp.abs(out - ref))}")

    print("KERNEL_OK")
</pallas_src>

<mosaic_0001>
module attributes {stable_mosaic.version = 11 : i64} {
  func.func @_mlp_kernel(%arg0: i32, %arg1: memref<16x247xf32, #tpu.memory_space<vmem>>, %arg2: memref<247x128xf32, #tpu.memory_space<vmem>>, %arg3: memref<1x128xf32, #tpu.memory_space<vmem>>, %arg4: memref<128x3xf32, #tpu.memory_space<vmem>>, %arg5: memref<1x3xf32, #tpu.memory_space<vmem>>, %arg6: memref<16x3xf32, #tpu.memory_space<vmem>>) attributes {dimension_semantics = [#tpu.dimension_semantics<parallel>], iteration_bounds = array<i64: 3>, scalar_prefetch = 0 : i64, scratch_operands = 0 : i64, tpu.core_type = #tpu.core_type<tc>, window_params = [{transform_indices = @transform_0, window_bounds = array<i64: 16, 247>}, {pipeline_mode = #tpu.pipeline_mode<synchronous>, transform_indices = @transform_1, window_bounds = array<i64: 247, 128>}, {pipeline_mode = #tpu.pipeline_mode<synchronous>, transform_indices = @transform_2, window_bounds = array<i64: 1, 128>}, {pipeline_mode = #tpu.pipeline_mode<synchronous>, transform_indices = @transform_3, window_bounds = array<i64: 128, 3>}, {pipeline_mode = #tpu.pipeline_mode<synchronous>, transform_indices = @transform_4, window_bounds = array<i64: 1, 3>}, {transform_indices = @transform_5, window_bounds = array<i64: 16, 3>}]} {
    %c0 = arith.constant 0 : index
    %c0_0 = arith.constant 0 : index
    %0 = vector.load %arg1[%c0, %c0_0] : memref<16x247xf32, #tpu.memory_space<vmem>>, vector<16x247xf32>
    %c0_1 = arith.constant 0 : index
    %c0_2 = arith.constant 0 : index
    %1 = vector.load %arg2[%c0_1, %c0_2] : memref<247x128xf32, #tpu.memory_space<vmem>>, vector<247x128xf32>
    %cst = arith.constant dense<0.000000e+00> : vector<16x128xf32>
    %2 = tpu.matmul %0, %1, %cst {dimension_numbers = #tpu.dot_dimension_numbers<[1], [0], [0], [1], [0, 0, 1, 1], [], []>} : vector<16x247xf32>, vector<247x128xf32>, vector<16x128xf32> -> vector<16x128xf32>
    %c0_3 = arith.constant 0 : index
    %c0_4 = arith.constant 0 : index
    %3 = vector.load %arg3[%c0_3, %c0_4] : memref<1x128xf32, #tpu.memory_space<vmem>>, vector<1x128xf32>
    %4 = vector.broadcast %3 : vector<1x128xf32> to vector<16x128xf32>
    %5 = arith.addf %2, %4 : vector<16x128xf32>
    %cst_5 = arith.constant 0.000000e+00 : f32
    %6 = vector.broadcast %cst_5 : f32 to vector<16x128xf32>
    %7 = arith.maximumf %5, %6 : vector<16x128xf32>
    %c0_6 = arith.constant 0 : index
    %c0_7 = arith.constant 0 : index
    %8 = vector.load %arg4[%c0_6, %c0_7] : memref<128x3xf32, #tpu.memory_space<vmem>>, vector<128x3xf32>
    %cst_8 = arith.constant dense<0.000000e+00> : vector<16x3xf32>
    %9 = tpu.matmul %7, %8, %cst_8 {dimension_numbers = #tpu.dot_dimension_numbers<[1], [0], [0], [1], [0, 0, 1, 1], [], []>} : vector<16x128xf32>, vector<128x3xf32>, vector<16x3xf32> -> vector<16x3xf32>
    %c0_9 = arith.constant 0 : index
    %c0_10 = arith.constant 0 : index
    %10 = vector.load %arg5[%c0_9, %c0_10] : memref<1x3xf32, #tpu.memory_space<vmem>>, vector<1x3xf32>
    %11 = vector.broadcast %10 : vector<1x3xf32> to vector<16x3xf32>
    %12 = arith.addf %9, %11 : vector<16x3xf32>
    %c0_11 = arith.constant 0 : index
    %c0_12 = arith.constant 0 : index
    %13 = vector.load %arg6[%c0_11, %c0_12] : memref<16x3xf32, #tpu.memory_space<vmem>>, vector<16x3xf32>
    tpu.vector_store %arg6[%c0_11, %c0_12], %12 {strides = array<i32>} : memref<16x3xf32, #tpu.memory_space<vmem>>, vector<16x3xf32>,
    return
  }
  func.func @transform_0(%arg0: i32) -> (i32, i32) {
    %c0_i32 = arith.constant 0 : i32
    %c0_i32_0 = arith.constant 0 : i32
    return %arg0, %c0_i32 : i32, i32
  }
  func.func @transform_1(%arg0: i32) -> (i32, i32) {
    %c0_i32 = arith.constant 0 : i32
    %c0_i32_0 = arith.constant 0 : i32
    %c0_i32_1 = arith.constant 0 : i32
    return %c0_i32, %c0_i32_0 : i32, i32
  }
  func.func @transform_2(%arg0: i32) -> (i32, i32) {
    %c0_i32 = arith.constant 0 : i32
    %c0_i32_0 = arith.constant 0 : i32
    %c0_i32_1 = arith.constant 0 : i32
    return %c0_i32, %c0_i32_0 : i32, i32
  }
  func.func @transform_3(%arg0: i32) -> (i32, i32) {
    %c0_i32 = arith.constant 0 : i32
    %c0_i32_0 = arith.constant 0 : i32
    %c0_i32_1 = arith.constant 0 : i32
    return %c0_i32, %c0_i32_0 : i32, i32
  }
  func.func @transform_4(%arg0: i32) -> (i32, i32) {
    %c0_i32 = arith.constant 0 : i32
    %c0_i32_0 = arith.constant 0 : i32
    %c0_i32_1 = arith.constant 0 : i32
    return %c0_i32, %c0_i32_0 : i32, i32
  }
  func.func @transform_5(%arg0: i32) -> (i32, i32) {
    %c0_i32 = arith.constant 0 : i32
    %c0_i32_0 = arith.constant 0 : i32
    return %arg0, %c0_i32 : i32, i32
  }
}

</mosaic_0001>

<llo_original>
// kernel: laser_regression.1
$region0: #{laser_regression.1}
  #allocation0 [shape = 'u32[]', space=smem, size = 0x4, offset = 0x4, fixed_abs, tag = 'smem constant byte address 0x4 - core index']
  #allocation1 [shape = 'u32[144,128]{1,0:T(1,128)}', space=vmem, size = 0x12000, scoped, tag = 'internal scratch']
  %s0 = inlined_call_operand.vmem [shape: f32[37,247], index: 0, kind: input, shape index: {}]
  %s1 = inlined_call_operand.hbm [shape: f32[247,128], index: 1, kind: input, shape index: {}]
  %s2 = inlined_call_operand.vmem [shape: f32[1,128], index: 2, kind: input, shape index: {}]
  %s3 = inlined_call_operand.vmem [shape: f32[128,3], index: 3, kind: input, shape index: {}]
  %s4 = inlined_call_operand.vmem [shape: f32[1,3], index: 4, kind: input, shape index: {}]
  %s5 = inlined_call_operand.vmem [shape: f32[37,3], index: 5, kind: output, shape index: {}]
  %s6 = sld [smem:[#allocation0]]
  $region105: #{laser_regression.1} parent=0
    _
  %s8 = ssub.s32 1, %s6
  %s9 = scalar_select 0, %s8, %s6
  $region1: #{laser_regression.1} parent=0
    #allocation2 [shape = 'u8[126976]{0}', space=vmem, size = 0x1f000, scoped, tag = 'input window, operand 1, single buffered']
    #allocation3 [shape = 's32[2]{0}', space=sflag, size = 0x8, scoped, tag = 'scoped memory for laser_regression.1']
    #allocation4 [shape = 'u8[16384]{0}', space=vmem, size = 0x4000, scoped, tag = 'output window, operand 0']
    %10 = vsyncpa [#allocation3], 0
    loop: start=0, step=1, limit=5
    $region2: #{laser_regression.1} parent=1 // loop_pre_header
      _
    $region3: #{laser_regression.1} parent=1 // loop_header
      %s12 = sphi 0, %s16
      %p13 = scmp.ge.s32.totalorder %s12, 5
      %s22 = sphi 0, %s24
      %s25 = sphi 0, %s22
      %s26 = sphi 0, %s25
      %s42 = sphi 0, %s26
      %s46 = sphi 0, %s46
      %s48 = sphi 0, %s46
      %s49 = sphi 0, %s48
      %s63 = sphi 0, %s49
      %s67 = sphi 0, %s67
      %s69 = sphi 0, %s67
      %s70 = sphi 0, %s69
      %s84 = sphi 0, %s70
      %s88 = sphi 0, %s88
      %s90 = sphi 0, %s88
      %s91 = sphi 0, %s90
      %s105 = sphi 0, %s91
      %s109 = sphi 0, %s109
      %s111 = sphi 0, %s109
      %s112 = sphi 0, %s111
      %s126 = sphi 0, %s112
      %s132 = sphi 0, %s134
      %s135 = sphi 0, %s132
      %s136 = sphi 0, %s135
      %s152 = sphi 0, %s136
    $region4: #{laser_regression.1} parent=1 // loop_header_branch
      %15 = sbr.rel (%p13) target = $region8
    $region5: #{laser_regression.1} parent=1 // loop_body
      %s17 = ssub.s32 %s12, 1
      %s18 = ssub.s32 %s12, 2
      %s19 = sadd.s32 %s12, 1
      %s20 = ssub.s32 %s12, %s19
      %p21 = scmp.eq.s32.totalorder %s20, 0
      %s23 = sadd.s32 %s22, 1
      %s24 = scalar_select %p21, %s22, %s23
      %p27 = pneg %p21
      %p28 = scmp.eq.s32.totalorder %s12, 2
      %p29 = por %p27, %p28
      %p30 = scmp.ne.s32.totalorder %s22, %s25
      %p31 = scmp.eq.s32.totalorder %s12, 0
      %p32 = por %p30, %p31
      %p33 = scmp.ne.s32.totalorder %s22, %s25
      %p34 = scmp.eq.s32.totalorder %s17, 2
      %p35 = por %p33, %p34
      %p36 = scmp.ne.s32.totalorder %s25, %s26
      %p37 = scmp.eq.s32.totalorder %s17, 0
      %p38 = por %p36, %p37
      %p39 = scmp.ne.s32.totalorder %s25, %s26
      %p40 = scmp.eq.s32.totalorder %s18, 2
      %p41 = por %p39, %p40
      %p43 = scmp.ne.s32.totalorder %s26, %s42
      %p44 = scmp.eq.s32.totalorder %s18, 0
      %p45 = por %p43, %p44
      %s47 = sadd.s32 %s46, 1
      %p50 = scmp.eq.s32.totalorder %s12, 2
      %p51 = scmp.ne.s32.totalorder %s46, %s48
      %p52 = scmp.eq.s32.totalorder %s12, 0
      %p53 = por %p51, %p52
      %p54 = scmp.ne.s32.totalorder %s46, %s48
      %p55 = scmp.eq.s32.totalorder %s17, 2
      %p56 = por %p54, %p55
      %p57 = scmp.ne.s32.totalorder %s48, %s49
      %p58 = scmp.eq.s32.totalorder %s17, 0
      %p59 = por %p57, %p58
      %p60 = scmp.ne.s32.totalorder %s48, %s49
      %p61 = scmp.eq.s32.totalorder %s18, 2
      %p62 = por %p60, %p61
      %p64 = scmp.ne.s32.totalorder %s49, %s63
      %p65 = scmp.eq.s32.totalorder %s18, 0
      %p66 = por %p64, %p65
      %s68 = sadd.s32 %s67, 1
      %p71 = scmp.eq.s32.totalorder %s12, 2
      %p72 = scmp.ne.s32.totalorder %s67, %s69
      %p73 = scmp.eq.s32.totalorder %s12, 0
      %p74 = por %p72, %p73
      %p75 = scmp.ne.s32.totalorder %s67, %s69
      %p76 = scmp.eq.s32.totalorder %s17, 2
      %p77 = por %p75, %p76
      %p78 = scmp.ne.s32.totalorder %s69, %s70
      %p79 = scmp.eq.s32.totalorder %s17, 0
      %p80 = por %p78, %p79
      %p81 = scmp.ne.s32.totalorder %s69, %s70
      %p82 = scmp.eq.s32.totalorder %s18, 2
      %p83 = por %p81, %p82
      %p85 = scmp.ne.s32.totalorder %s70, %s84
      %p86 = scmp.eq.s32.totalorder %s18, 0
      %p87 = por %p85, %p86
      %s89 = sadd.s32 %s88, 1
      %p92 = scmp.eq.s32.totalorder %s12, 2
      %p93 = scmp.ne.s32.totalorder %s88, %s90
      %p94 = scmp.eq.s32.totalorder %s12, 0
      %p95 = por %p93, %p94
      %p96 = scmp.ne.s32.totalorder %s88, %s90
      %p97 = scmp.eq.s32.totalorder %s17, 2
      %p98 = por %p96, %p97
      %p99 = scmp.ne.s32.totalorder %s90, %s91
      %p100 = scmp.eq.s32.totalorder %s17, 0
      %p101 = por %p99, %p100
      %p102 = scmp.ne.s32.totalorder %s90, %s91
      %p103 = scmp.eq.s32.totalorder %s18, 2
      %p104 = por %p102, %p103
      %p106 = scmp.ne.s32.totalorder %s91, %s105
      %p107 = scmp.eq.s32.totalorder %s18, 0
      %p108 = por %p106, %p107
      %s110 = sadd.s32 %s109, 1
      %p113 = scmp.eq.s32.totalorder %s12, 2
      %p114 = scmp.ne.s32.totalorder %s109, %s111
      %p115 = scmp.eq.s32.totalorder %s12, 0
      %p116 = por %p114, %p115
      %p117 = scmp.ne.s32.totalorder %s109, %s111
      %p118 = scmp.eq.s32.totalorder %s17, 2
      %p119 = por %p117, %p118
      %p120 = scmp.ne.s32.totalorder %s111, %s112
      %p121 = scmp.eq.s32.totalorder %s17, 0
      %p122 = por %p120, %p121
      %p123 = scmp.ne.s32.totalorder %s111, %s112
      %p124 = scmp.eq.s32.totalorder %s18, 2
      %p125 = por %p123, %p124
      %p127 = scmp.ne.s32.totalorder %s112, %s126
      %p128 = scmp.eq.s32.totalorder %s18, 0
      %p129 = por %p127, %p128
      %s130 = ssub.s32 %s12, %s19
      %p131 = scmp.eq.s32.totalorder %s130, 0
      %s133 = sadd.s32 %s132, 1
      %s134 = scalar_select %p131, %s132, %s133
      %p137 = pneg %p131
      %p138 = scmp.eq.s32.totalorder %s12, 2
      %p139 = por %p137, %p138
      %p140 = scmp.ne.s32.totalorder %s132, %s135
      %p141 = scmp.eq.s32.totalorder %s12, 0
      %p142 = por %p140, %p141
      %p143 = scmp.ne.s32.totalorder %s132, %s135
      %p144 = scmp.eq.s32.totalorder %s17, 2
      %p145 = por %p143, %p144
      %p146 = scmp.ne.s32.totalorder %s135, %s136
      %p147 = scmp.eq.s32.totalorder %s17, 0
      %p148 = por %p146, %p147
      %p149 = scmp.ne.s32.totalorder %s135, %s136
      %p150 = scmp.eq.s32.totalorder %s18, 2
      %p151 = por %p149, %p150
      %p153 = scmp.ne.s32.totalorder %s136, %s152
      %p154 = scmp.eq.s32.totalorder %s18, 0
      %p155 = por %p153, %p154
      %p156 = scmp.le.s32.totalorder 1, %s12
      %p157 = scmp.lt.s32.totalorder %s12, 4
      %p158 = pnand %p156, %p157
      %p159 = pneg %p158
      // Predicated region
      $region9: #{laser_regression.1} parent=5 // pred_check
        _
      $region10: #{laser_regression.1} parent=5 // pred_check_branch
        %161 = sbr.rel (%p158) target = $region12
      $region11: #{laser_regression.1} parent=5 // pred_region
        %s162 = ssub.s32 %s12, 1
        // Predicated region
        $region13: #{laser_regression.1} parent=11 // pred_check
          %p163 = pneg %p59
        $region14: #{laser_regression.1} parent=11 // pred_check_branch
          %165 = sbr.rel (%p163) target = $region16
        $region15: #{laser_regression.1} parent=11 // pred_region
          %s167 = ssub.s32 3968, 3968
          %168 = vsyncadd [#allocation3], %s167
          %s169 = sshll.u32 [#allocation2], 4
          %s170 = int_to_ptr.vmem [resolvable:$true] %s169
          %175 = dma.hbm_to_vmem [thread:$0]  %s1, 3968, %s170, [#allocation3], 128, 128, 8
        $region16: #{laser_regression.1} parent=11 // pred_fallthru
          _
        // Predicated region
        $region17: #{laser_regression.1} parent=11 // pred_check
          %p176 = pneg %p80
        $region18: #{laser_regression.1} parent=11 // pred_check_branch
          %178 = sbr.rel (%p176) target = $region20
        $region19: #{laser_regression.1} parent=11 // pred_region
          _
        $region20: #{laser_regression.1} parent=11 // pred_fallthru
          _
        // Predicated region
        $region21: #{laser_regression.1} parent=11 // pred_check
          %p179 = pneg %p101
        $region22: #{laser_regression.1} parent=11 // pred_check_branch
          %181 = sbr.rel (%p179) target = $region24
        $region23: #{laser_regression.1} parent=11 // pred_region
          _
        $region24: #{laser_regression.1} parent=11 // pred_fallthru
          _
        // Predicated region
        $region25: #{laser_regression.1} parent=11 // pred_check
          %p182 = pneg %p122
        $region26: #{laser_regression.1} parent=11 // pred_check_branch
          %184 = sbr.rel (%p182) target = $region28
        $region27: #{laser_regression.1} parent=11 // pred_region
          _
        $region28: #{laser_regression.1} parent=11 // pred_fallthru
          _
      $region12: #{laser_regression.1} parent=5 // pred_fallthru
        _
      %p185 = scmp.lt.s32.totalorder %s12, 3
      // Predicated region
      $region29: #{laser_regression.1} parent=5 // pred_check
        %p186 = pneg %p185
      $region30: #{laser_regression.1} parent=5 // pred_check_branch
        %188 = sbr.rel (%p186) target = $region32
      $region31: #{laser_regression.1} parent=5 // pred_region
        // Predicated region
        $region33: #{laser_regression.1} parent=31 // pred_check
          %p189 = pneg %p32
        $region34: #{laser_regression.1} parent=31 // pred_check_branch
          %191 = sbr.rel (%p189) target = $region36
        $region35: #{laser_regression.1} parent=31 // pred_region
          %s192 = smul.u32 2, %s12
          %s193 = ssub.s32 5, %s192
          %p194 = scmp.lt.s32.totalorder %s193, 2
          %s195 = scalar_select %p194, %s193, 2
          %s196 = smul.u32 128, %s195
          %s197 = smul.u32 %s196, 2
          %p198 = scmp.lt.s32.totalorder %s192, 4
          %s199 = scalar_select %p198, %s192, 4
          %s200 = smul.addr %s199, 2
          %s201 = smul.addr %s200, 8
          %s202 = scalar_lea.vmem %s0, %s201
          %s203 = smul.u32 2, %s12
          %s204 = ssub.s32 5, %s203
          %p205 = scmp.lt.s32.totalorder %s204, 2
          %s206 = scalar_select %p205, %s204, 2
          %s207 = smul.u32 128, %s206
          %s208 = smul.u32 %s207, 2
        $region36: #{laser_regression.1} parent=31 // pred_fallthru
          _
      $region32: #{laser_regression.1} parent=5 // pred_fallthru
        _
      %p209 = scmp.le.s32.totalorder 1, %s12
      %p210 = scmp.lt.s32.totalorder %s12, 4
      %p211 = pnand %p209, %p210
      %p212 = pneg %p211
      // Predicated region
      $region37: #{laser_regression.1} parent=5 // pred_check
        _
      $region38: #{laser_regression.1} parent=5 // pred_check_branch
        %214 = sbr.rel (%p211) target = $region40
      $region39: #{laser_regression.1} parent=5 // pred_region
        %s215 = ssub.s32 %s12, 1
        // Predicated region
        $region41: #{laser_regression.1} parent=39 // pred_check
          %p216 = pneg %p59
        $region42: #{laser_regression.1} parent=39 // pred_check_branch
          %218 = sbr.rel (%p216) target = $region44
        $region43: #{laser_regression.1} parent=39 // pred_region
          %219 = dma.done [#allocation3], 3968
        $region44: #{laser_regression.1} parent=39 // pred_fallthru
          _
        %s220 = smul.u32 2, %s17
        %s221 = ssub.s32 5, %s220
        %p222 = scmp.lt.s32.totalorder %s221, 2
        %s223 = scalar_select %p222, %s221, 2
        %s224 = smul.u32 128, %s223
        %s225 = smul.u32 %s224, 2
        %p226 = scmp.lt.s32.totalorder %s220, 4
        %s227 = scalar_select %p226, %s220, 4
        %s228 = smul.addr %s227, 2
        %s229 = smul.addr %s228, 8
        %s230 = scalar_lea.vmem %s0, %s229
        %p231 = pneg %p38
        %p232 = pneg %p35
        %p233 = pneg %p59
        %p234 = pneg %p56
        %p235 = pneg %p80
        %p236 = pneg %p77
        %p237 = pneg %p101
        %p238 = pneg %p98
        %p239 = pneg %p122
        %p240 = pneg %p119
        %p241 = pneg %p148
        %p242 = pneg %p145
        %s243 = sand.u32 %s135, 1
        %s244 = sand.u32 %s135, 1
        %s245 = smul.addr %s244, 16
        %s246 = scalar_lea.vmem [#allocation4], %s245
        %s247 = smul.u32 2, %s17
        %s248 = ssub.s32 5, %s247
        %p249 = scmp.lt.s32.totalorder %s248, 2
        %s250 = scalar_select %p249, %s248, 2
        %s251 = smul.u32 128, %s250
        %s252 = smul.u32 %s251, 2
        %p253 = scmp.lt.s32.totalorder %s247, 4
        %s254 = scalar_select %p253, %s247, 4
        %s255 = smul.addr %s254, 2
        %s256 = smul.addr %s255, 8
        %s257 = scalar_lea.vmem %s0, %s256
        %s258 = smul.u32 2, %s17
        %s259 = ssub.s32 5, %s258
        %p260 = scmp.lt.s32.totalorder %s259, 2
        %s261 = scalar_select %p260, %s259, 2
        %s262 = smul.u32 128, %s261
        %s263 = smul.u32 %s262, 2
        %s264 = smul.u32 2, %s17
        %s265 = ssub.s32 5, %s264
        %p266 = scmp.lt.s32.totalorder %s265, 2
        %s267 = scalar_select %p266, %s265, 2
        %s268 = smul.u32 128, %s267
        %v269 = vld [vmem:[%s257] sm:$0xff]
        %v270 = vld [vmem:[%s257 + $0x8] sm:$0xff]
        %v271 = vld [vmem:[%s257 + $0x10] sm:$0xff]
        %v272 = vld [vmem:[%s257 + $0x18] sm:$0xff]
        %v273 = vld [vmem:[#allocation2] sm:$0xff]
        %v274 = vld [vmem:[#allocation2 + $0x8] sm:$0xff]
        %v275 = vld [vmem:[#allocation2 + $0x10] sm:$0xff]
        %v276 = vld [vmem:[#allocation2 + $0x18] sm:$0xff]
        %v277 = vld [vmem:[#allocation2 + $0x20] sm:$0xff]
        %v278 = vld [vmem:[#allocation2 + $0x28] sm:$0xff]
        %v279 = vld [vmem:[#allocation2 + $0x30] sm:$0xff]
        %v280 = vld [vmem:[#allocation2 + $0x38] sm:$0xff]
        %v281 = vld [vmem:[#allocation2 + $0x40] sm:$0xff]
        %v282 = vld [vmem:[#allocation2 + $0x48] sm:$0xff]
        %v283 = vld [vmem:[#allocation2 + $0x50] sm:$0xff]
        %v284 = vld [vmem:[#allocation2 + $0x58] sm:$0xff]
        %v285 = vld [vmem:[#allocation2 + $0x60] sm:$0xff]
        %v286 = vld [vmem:[#allocation2 + $0x68] sm:$0xff]
        %v287 = vld [vmem:[#allocation2 + $0x70] sm:$0xff]
        %v288 = vld [vmem:[#allocation2 + $0x78] sm:$0xff]
        %v289 = vld [vmem:[#allocation2 + $0x80] sm:$0xff]
        %v290 = vld [vmem:[#allocation2 + $0x88] sm:$0xff]
        %v291 = vld [vmem:[#allocation2 + $0x90] sm:$0xff]
        %v292 = vld [vmem:[#allocation2 + $0x98] sm:$0xff]
        %v293 = vld [vmem:[#allocation2 + $0xa0] sm:$0xff]
        %v294 = vld [vmem:[#allocation2 + $0xa8] sm:$0xff]
        %v295 = vld [vmem:[#allocation2 + $0xb0] sm:$0xff]
        %v296 = vld [vmem:[#allocation2 + $0xb8] sm:$0xff]
        %v297 = vld [vmem:[#allocation2 + $0xc0] sm:$0xff]
        %v298 = vld [vmem:[#allocation2 + $0xc8] sm:$0xff]
        %v299 = vld [vmem:[#allocation2 + $0xd0] sm:$0xff]
        %v300 = vld [vmem:[#allocation2 + $0xd8] sm:$0xff]
        %v301 = vld [vmem:[#allocation2 + $0xe0] sm:$0xff]
        %v302 = vld [vmem:[#allocation2 + $0xe8] sm:$0xff]
        %v303 = vld [vmem:[#allocation2 + $0xf0] sm:$0x7f]
        %v304 = vld [vmem:[%s2] sm:$0x1]
        %v306 = vlaneseq
        %v307 = vshrl.u32 %v306, 7
        %v308 = vsub.s32 0, %v307
        %v309 = vrot.slane %v304, %v308
        %vm311 = vcmask 973824
        %v313 = vsel %vm311, %v270, 0
        %v316 = vsel %vm311, %v272, 0
        %vm318 = vcmask 1046528
        %v320 = vsel %vm318, %v303, 0
        %322 = vmatprep.subr.mxu0 0.0
        %323 = vmatpush1.msra.mxu0 %v273
        %324 = vmatprep.subr.mxu0 0.0
        %325 = vmatpush1.msra.mxu0 %v274
        %326 = vmatprep.subr.mxu0 0.0
        %327 = vmatpush1.msra.mxu0 %v275
        %328 = vmatprep.subr.mxu0 0.0
        %329 = vmatpush1.msra.mxu0 %v276
        %330 = vmatprep.subr.mxu0 0.0
        %331 = vmatpush1.msra.mxu0 %v277
        %332 = vmatprep.subr.mxu0 0.0
        %333 = vmatpush1.msra.mxu0 %v278
        %334 = vmatprep.subr.mxu0 0.0
        %335 = vmatpush1.msra.mxu0 %v279
        %336 = vmatprep.subr.mxu0 0.0
        %337 = vmatpush1.msra.mxu0 %v280
        %338 = vmatprep.subr.mxu0 0.0
        %339 = vmatpush1.msra.mxu0 %v281
        %340 = vmatprep.subr.mxu0 0.0
        %341 = vmatpush1.msra.mxu0 %v282
        %342 = vmatprep.subr.mxu0 0.0
        %343 = vmatpush1.msra.mxu0 %v283
        %344 = vmatprep.subr.mxu0 0.0
        %345 = vmatpush1.msra.mxu0 %v284
        %346 = vmatprep.subr.mxu0 0.0
        %347 = vmatpush1.msra.mxu0 %v285
        %348 = vmatprep.subr.mxu0 0.0
        %349 = vmatpush1.msra.mxu0 %v286
        %350 = vmatprep.subr.mxu0 0.0
        %351 = vmatpush1.msra.mxu0 %v287
        %352 = vmatprep.subr.mxu0 0.0
        %353 = vmatpush1.msra.mxu0 %v288
        %354 = vmatprep.subr.mxu0 0.0
        %355 = vmatpush1.msra.mxu0 %v289
        %356 = vmatprep.subr.mxu0 0.0
        %357 = vmatpush1.msra.mxu0 %v290
        %358 = vmatprep.subr.mxu0 0.0
        %359 = vmatpush1.msra.mxu0 %v291
        %360 = vmatprep.subr.mxu0 0.0
        %361 = vmatpush1.msra.mxu0 %v292
        %362 = vmatprep.subr.mxu0 0.0
        %363 = vmatpush1.msra.mxu0 %v293
        %364 = vmatprep.subr.mxu0 0.0
        %365 = vmatpush1.msra.mxu0 %v294
        %366 = vmatprep.subr.mxu0 0.0
        %367 = vmatpush1.msra.mxu0 %v295
        %368 = vmatprep.subr.mxu0 0.0
        %369 = vmatpush1.msra.mxu0 %v296
        %370 = vmatprep.subr.mxu0 0.0
        %371 = vmatpush1.msra.mxu0 %v297
        %372 = vmatprep.subr.mxu0 0.0
        %373 = vmatpush1.msra.mxu0 %v298
        %374 = vmatprep.subr.mxu0 0.0
        %375 = vmatpush1.msra.mxu0 %v299
        %376 = vmatprep.subr.mxu0 0.0
        %377 = vmatpush1.msra.mxu0 %v300
        %378 = vmatprep.subr.mxu0 0.0
        %379 = vmatpush1.msra.mxu0 %v301
        %380 = vmatprep.subr.mxu0 0.0
        %381 = vmatpush1.msra.mxu0 %v302
        %382 = vmatprep.subr.mxu0 0.0
        %383 = vmatpush1.msra.mxu0 %v320
        %384 = vmatprep.subr.mxu0 0.0
        %385 = vmatpush1.msra.mxu0 0.0
        %386 = vmatprep.mubr.f32.mxu0 %v313
        %387 = vmatmul.mubr.f32.gmra.mrb[0].mxu0 %v269
        %v388 = vpop.f32.mrb[0].mxu0
        %v389 = vadd.f32 %v309, %v388
        %v390 = vpop.f32.mrb[0].mxu0
        %391 = vmatprep.mubr.f32.mxu0 %v316
        %392 = vmatmul.mubr.f32.gmra.mrb[0].mxu0 %v271
        %v393 = vpop.f32.mrb[0].mxu0
        %v394 = vadd.f32 %v309, %v393
        %v395 = vpop.f32.mrb[0].mxu0
        %396 = vdwg.mxu0
        %v397 = vmax.f32 %v389, 0.0
        %v398 = vmax.f32 %v394, 0.0
        %v399 = vld [vmem:[%s3] sm:$0xff]
        %v400 = vld [vmem:[%s3 + $0x8] sm:$0xff]
        %v401 = vld [vmem:[%s3 + $0x10] sm:$0xff]
        %v402 = vld [vmem:[%s3 + $0x18] sm:$0xff]
        %v403 = vld [vmem:[%s3 + $0x20] sm:$0xff]
        %v404 = vld [vmem:[%s3 + $0x28] sm:$0xff]
        %v405 = vld [vmem:[%s3 + $0x30] sm:$0xff]
        %v406 = vld [vmem:[%s3 + $0x38] sm:$0xff]
        %v407 = vld [vmem:[%s3 + $0x40] sm:$0xff]
        %v408 = vld [vmem:[%s3 + $0x48] sm:$0xff]
        %v409 = vld [vmem:[%s3 + $0x50] sm:$0xff]
        %v410 = vld [vmem:[%s3 + $0x58] sm:$0xff]
        %v411 = vld [vmem:[%s3 + $0x60] sm:$0xff]
        %v412 = vld [vmem:[%s3 + $0x68] sm:$0xff]
        %v413 = vld [vmem:[%s3 + $0x70] sm:$0xff]
        %v414 = vld [vmem:[%s3 + $0x78] sm:$0xff]
        %v415 = vld [vmem:[%s4] sm:$0x1]
        %v417 = vlaneseq
        %v418 = vshrl.u32 %v417, 7
        %v419 = vsub.s32 0, %v418
        %v420 = vrot.slane %v415, %v419
        %422 = vmatprep.subr.mxu0 0.0
        %423 = vmatpush1.msra.mxu0 %v399
        %424 = vmatprep.subr.mxu0 0.0
        %425 = vmatpush1.msra.mxu0 %v400
        %426 = vmatprep.subr.mxu0 0.0
        %427 = vmatpush1.msra.mxu0 %v401
        %428 = vmatprep.subr.mxu0 0.0
        %429 = vmatpush1.msra.mxu0 %v402
        %430 = vmatprep.subr.mxu0 0.0
        %431 = vmatpush1.msra.mxu0 %v403
        %432 = vmatprep.subr.mxu0 0.0
        %433 = vmatpush1.msra.mxu0 %v404
        %434 = vmatprep.subr.mxu0 0.0
        %435 = vmatpush1.msra.mxu0 %v405
        %436 = vmatprep.subr.mxu0 0.0
        %437 = vmatpush1.msra.mxu0 %v406
        %438 = vmatprep.subr.mxu0 0.0
        %439 = vmatpush1.msra.mxu0 %v407
        %440 = vmatprep.subr.mxu0 0.0
        %441 = vmatpush1.msra.mxu0 %v408
        %442 = vmatprep.subr.mxu0 0.0
        %443 = vmatpush1.msra.mxu0 %v409
        %444 = vmatprep.subr.mxu0 0.0
        %445 = vmatpush1.msra.mxu0 %v410
        %446 = vmatprep.subr.mxu0 0.0
        %447 = vmatpush1.msra.mxu0 %v411
        %448 = vmatprep.subr.mxu0 0.0
        %449 = vmatpush1.msra.mxu0 %v412
        %450 = vmatprep.subr.mxu0 0.0
        %451 = vmatpush1.msra.mxu0 %v413
        %452 = vmatprep.subr.mxu0 0.0
        %453 = vmatpush1.msra.mxu0 %v414
        %454 = vmatprep.subr.mxu0 0.0
        %455 = vmatpush1.msra.mxu0 0.0
        %456 = vmatprep.subr.mxu0 0.0
        %457 = vmatpush1.msra.mxu0 0.0
        %458 = vmatprep.subr.mxu0 0.0
        %459 = vmatpush1.msra.mxu0 0.0
        %460 = vmatprep.subr.mxu0 0.0
        %461 = vmatpush1.msra.mxu0 0.0
        %462 = vmatprep.subr.mxu0 0.0
        %463 = vmatpush1.msra.mxu0 0.0
        %464 = vmatprep.subr.mxu0 0.0
        %465 = vmatpush1.msra.mxu0 0.0
        %466 = vmatprep.subr.mxu0 0.0
        %467 = vmatpush1.msra.mxu0 0.0
        %468 = vmatprep.subr.mxu0 0.0
        %469 = vmatpush1.msra.mxu0 0.0
        %470 = vmatprep.subr.mxu0 0.0
        %471 = vmatpush1.msra.mxu0 0.0
        %472 = vmatprep.subr.mxu0 0.0
        %473 = vmatpush1.msra.mxu0 0.0
        %474 = vmatprep.subr.mxu0 0.0
        %475 = vmatpush1.msra.mxu0 0.0
        %476 = vmatprep.subr.mxu0 0.0
        %477 = vmatpush1.msra.mxu0 0.0
        %478 = vmatprep.subr.mxu0 0.0
        %479 = vmatpush1.msra.mxu0 0.0
        %480 = vmatprep.subr.mxu0 0.0
        %481 = vmatpush1.msra.mxu0 0.0
        %482 = vmatprep.subr.mxu0 0.0
        %483 = vmatpush1.msra.mxu0 0.0
        %484 = vmatprep.subr.mxu0 0.0
        %485 = vmatpush1.msra.mxu0 0.0
        %486 = vmatprep.mubr.f32.mxu0 0.0
        %487 = vmatmul.mubr.f32.gmra.mrb[0].mxu0 %v397
        %v488 = vpop.f32.mrb[0].mxu0
        %v489 = vadd.f32 %v420, %v488
        %v490 = vpop.f32.mrb[0].mxu0
        %491 = vmatprep.mubr.f32.mxu0 0.0
        %492 = vmatmul.mubr.f32.gmra.mrb[0].mxu0 %v398
        %v493 = vpop.f32.mrb[0].mxu0
        %v494 = vadd.f32 %v420, %v493
        %v495 = vpop.f32.mrb[0].mxu0
        %496 = vdwg.mxu0
        %vm497 = vcmask 23552
        %498 = vst.msk [vmem:[%s246] sm:$0xff] %vm497, %v489
        %499 = vst.msk [vmem:[%s246 + $0x8] sm:$0xff] %vm497, %v494
        %s500 = sand.u32 %s135, 1
        %s501 = sand.u32 %s135, 1
        %s502 = smul.addr %s501, 16
        %s503 = scalar_lea.vmem [#allocation4], %s502
        // Predicated region
        $region45: #{laser_regression.1} parent=39 // pred_check
          %p504 = pneg %p145
        $region46: #{laser_regression.1} parent=39 // pred_check_branch
          %506 = sbr.rel (%p504) target = $region48
        $region47: #{laser_regression.1} parent=39 // pred_region
          %s507 = smul.u32 2, %s17
          %s508 = ssub.s32 5, %s507
          %p509 = scmp.lt.s32.totalorder %s508, 2
          %s510 = scalar_select %p509, %s508, 2
          %s511 = smul.u32 128, %s510
          %p512 = scmp.ne.s32.totalorder 0, %s511
          %s513 = smul.addr %s507, 8
          %s514 = scalar_lea.vmem %s5, %s513
          // Predicated region
          $region49: #{laser_regression.1} parent=47 // pred_check
            %p515 = pneg %p512
          $region50: #{laser_regression.1} parent=47 // pred_check_branch
            %517 = sbr.rel (%p515) target = $region52
          $region51: #{laser_regression.1} parent=47 // pred_region
            // Predicated region
            $region53: #{laser_regression.1} parent=51 // pred_check
              _
            $region54: #{laser_regression.1} parent=51 // pred_check_branch
              %519 = sbr.rel (0) target = $region56
            $region55: #{laser_regression.1} parent=51 // pred_region
              // Predicated region
              $region75: #{laser_regression.1} parent=55 // pred_check
                _
              $region76: #{laser_regression.1} parent=55 // pred_check_branch
                %570 = sbr.rel (0) target = $region78
              $region77: #{laser_regression.1} parent=55 // pred_region
                %s571 = sshrl.u32 %s510, 1
                // While loop
                $region79: #{laser_regression.1} parent=77 // loop_pre_header
                  _
                $region80: #{laser_regression.1} parent=77 // loop_header
                  %s573 = sphi 0, %s575
                  %p574 = scmp.ge.s32.totalorder %s573, %s571
                  %s578 = sphi 0, %s587
                  %s579 = sphi %s503, %s590
                  %s580 = sphi %s514, %s591
                $region81: #{laser_regression.1} parent=77 // loop_header_branch
                  %577 = sbr.rel (%p574) target = $region85
                $region82: #{laser_regression.1} parent=77 // loop_body
                  %v581 = vld [vmem:[%s579] sm:$0xff]
                  %582 = vst [vmem:[%s580] sm:$0xff] %v581
                  %v583 = vld [vmem:[%s579 + $0x8] sm:$0xff]
                  %584 = vst [vmem:[%s580 + $0x8] sm:$0xff] %v583
                  %s585 = sadd.s32 1, %s578
                  %p586 = scmp.ge.s32.totalorder %s585, %s571
                  %s587 = scalar_select %p586, 0, %s585
                  %s588 = smul.u32 %s587, 16
                  %s589 = smul.u32 %s587, 16
                  %s590 = scalar_lea.vmem %s503, %s588 [#allocation4]
                  %s591 = scalar_lea.vmem %s514, %s589
                $region83: #{laser_regression.1} parent=77 // loop_footer
                  %s575 = sadd.s32 %s573, 1
                $region84: #{laser_regression.1} parent=77 // loop_footer_branch
                  %572 = sbr.rel target = $region80
                $region85: #{laser_regression.1} parent=77 // loop_exit
                  _
                %s592 = sshrl.u32 %s510, 1
                %s593 = sand.u32 %s510, 1
                %s594 = smul.u32 %s592, 2
                %s595 = smul.u32 8, %s594
                %s596 = scalar_lea.vmem %s503, %s595 [#allocation4]
                %s597 = smul.u32 8, %s594
                %s598 = scalar_lea.vmem %s514, %s597
                // While loop
                $region86: #{laser_regression.1} parent=77 // loop_pre_header
                  _
                $region87: #{laser_regression.1} parent=77 // loop_header
                  %s600 = sphi 0, %s602
                  %p601 = scmp.ge.s32.totalorder %s600, %s593
                  %s605 = sphi 0, %s612
                  %s606 = sphi %s596, %s615
                  %s607 = sphi %s598, %s616
                $region88: #{laser_regression.1} parent=77 // loop_header_branch
                  %604 = sbr.rel (%p601) target = $region92
                $region89: #{laser_regression.1} parent=77 // loop_body
                  %v608 = vld [vmem:[%s606] sm:$0xff]
                  %609 = vst [vmem:[%s607] sm:$0xff] %v608
                  %s610 = sadd.s32 1, %s605
                  %p611 = scmp.ge.s32.totalorder %s610, %s593
                  %s612 = scalar_select %p611, 0, %s610
                  %s613 = smul.u32 %s612, 8
                  %s614 = smul.u32 %s612, 8
                  %s615 = scalar_lea.vmem %s596, %s613 [#allocation4]
                  %s616 = scalar_lea.vmem %s598, %s614
                $region90: #{laser_regression.1} parent=77 // loop_footer
                  %s602 = sadd.s32 %s600, 1
                $region91: #{laser_regression.1} parent=77 // loop_footer_branch
                  %599 = sbr.rel target = $region87
                $region92: #{laser_regression.1} parent=77 // loop_exit
                  _
              $region78: #{laser_regression.1} parent=55 // pred_fallthru
                _
              // Predicated region
              $region93: #{laser_regression.1} parent=55 // pred_check
                _
              $region94: #{laser_regression.1} parent=55 // pred_check_branch
                %618 = sbr.rel target = $region96
              $region95: #{laser_regression.1} parent=55 // pred_region
                _
              $region96: #{laser_regression.1} parent=55 // pred_fallthru
                _
            $region56: #{laser_regression.1} parent=51 // pred_fallthru
              _
            // Predicated region
            $region57: #{laser_regression.1} parent=51 // pred_check
              _
            $region58: #{laser_regression.1} parent=51 // pred_check_branch
              %521 = sbr.rel target = $region60
            $region59: #{laser_regression.1} parent=51 // pred_region
              %s523 = sshrl.u32 %s510, 1
              // While loop
              $region61: #{laser_regression.1} parent=59 // loop_pre_header
                _
              $region62: #{laser_regression.1} parent=59 // loop_header
                %s525 = sphi 0, %s527
                %p526 = scmp.ge.s32.totalorder %s525, %s523
                %s530 = sphi 0, %s539
                %s531 = sphi %s503, %s542
                %s532 = sphi %s514, %s543
              $region63: #{laser_regression.1} parent=59 // loop_header_branch
                %529 = sbr.rel (%p526) target = $region67
              $region64: #{laser_regression.1} parent=59 // loop_body
                %v533 = vld [vmem:[%s531] sm:$0xff]
                %534 = vst [vmem:[%s532] sm:$0xff] %v533
                %v535 = vld [vmem:[%s531 + $0x8] sm:$0xff]
                %536 = vst [vmem:[%s532 + $0x8] sm:$0xff] %v535
                %s537 = sadd.s32 1, %s530
                %p538 = scmp.ge.s32.totalorder %s537, %s523
                %s539 = scalar_select %p538, 0, %s537
                %s540 = smul.u32 %s539, 16
                %s541 = smul.u32 %s539, 16
                %s542 = scalar_lea.vmem %s503, %s540 [#allocation4]
                %s543 = scalar_lea.vmem %s514, %s541
              $region65: #{laser_regression.1} parent=59 // loop_footer
                %s527 = sadd.s32 %s525, 1
              $region66: #{laser_regression.1} parent=59 // loop_footer_branch
                %524 = sbr.rel target = $region62
              $region67: #{laser_regression.1} parent=59 // loop_exit
                _
              %s544 = sshrl.u32 %s510, 1
              %s545 = sand.u32 %s510, 1
              %s546 = smul.u32 %s544, 2
              %s547 = smul.u32 8, %s546
              %s548 = scalar_lea.vmem %s503, %s547 [#allocation4]
              %s549 = smul.u32 8, %s546
              %s550 = scalar_lea.vmem %s514, %s549
              // While loop
              $region68: #{laser_regression.1} parent=59 // loop_pre_header
                _
              $region69: #{laser_regression.1} parent=59 // loop_header
                %s552 = sphi 0, %s554
                %p553 = scmp.ge.s32.totalorder %s552, %s545
                %s557 = sphi 0, %s564
                %s558 = sphi %s548, %s567
                %s559 = sphi %s550, %s568
              $region70: #{laser_regression.1} parent=59 // loop_header_branch
                %556 = sbr.rel (%p553) target = $region74
              $region71: #{laser_regression.1} parent=59 // loop_body
                %v560 = vld [vmem:[%s558] sm:$0xff]
                %561 = vst [vmem:[%s559] sm:$0xff] %v560
                %s562 = sadd.s32 1, %s557
                %p563 = scmp.ge.s32.totalorder %s562, %s545
                %s564 = scalar_select %p563, 0, %s562
                %s565 = smul.u32 %s564, 8
                %s566 = smul.u32 %s564, 8
                %s567 = scalar_lea.vmem %s548, %s565 [#allocation4]
                %s568 = scalar_lea.vmem %s550, %s566
              $region72: #{laser_regression.1} parent=59 // loop_footer
                %s554 = sadd.s32 %s552, 1
              $region73: #{laser_regression.1} parent=59 // loop_footer_branch
                %551 = sbr.rel target = $region69
              $region74: #{laser_regression.1} parent=59 // loop_exit
                _
            $region60: #{laser_regression.1} parent=51 // pred_fallthru
              _
          $region52: #{laser_regression.1} parent=47 // pred_fallthru
            _
          %619 = vnop
        $region48: #{laser_regression.1} parent=39 // pred_fallthru
          _
      $region40: #{laser_regression.1} parent=5 // pred_fallthru
        _
      %p620 = scmp.le.s32.totalorder 2, %s12
      // Predicated region
      $region97: #{laser_regression.1} parent=5 // pred_check
        %p621 = pneg %p620
      $region98: #{laser_regression.1} parent=5 // pred_check_branch
        %623 = sbr.rel (%p621) target = $region100
      $region99: #{laser_regression.1} parent=5 // pred_region
        %s624 = ssub.s32 %s12, 2
        // Predicated region
        $region101: #{laser_regression.1} parent=99 // pred_check
          %p625 = pneg %p151
        $region102: #{laser_regression.1} parent=99 // pred_check_branch
          %627 = sbr.rel (%p625) target = $region104
        $region103: #{laser_regression.1} parent=99 // pred_region
          %s628 = sand.u32 %s136, 1
          %s629 = sand.u32 %s136, 1
          %s630 = smul.addr %s629, 16
          %s631 = scalar_lea.vmem [#allocation4], %s630
        $region104: #{laser_regression.1} parent=99 // pred_fallthru
          _
      $region100: #{laser_regression.1} parent=5 // pred_fallthru
        _
    $region6: #{laser_regression.1} parent=1 // loop_footer
      %s16 = sadd.s32 1, %s12
    $region7: #{laser_regression.1} parent=1 // loop_footer_branch
      %11 = sbr.rel target = $region3
    $region8: #{laser_regression.1} parent=1 // loop_exit
      _
    %632 = vsyncpa [#allocation3], 1
    %s633 = scalar_lea.sflag [#allocation3], 1
    %634 = vsyncpa %s633, 1

</llo_original>
